<compile_context>
chip_gen: v5e
topology: v5e:2x2
jax: 0.10.0
libtpu: 0.0.40
codegen_flags: <defaults>
</compile_context>

<pallas_src>
import math
import functools

import jax
import jax.numpy as jnp
from jax import lax
from jax.experimental import pallas as pl
from jax.experimental.pallas import tpu as pltpu


def _mlp_kernel(x_ref, w1_ref, b1_ref, w2_ref, b2_ref, o_ref):
    x = x_ref[...]
    if x.dtype != w1_ref.dtype:
        x = x.astype(w1_ref.dtype)

    # fc1 on the MXU: x (TM, in) contracted with w1 (hidden, in) over the
    # last dim of both ("q @ k.T" pattern) -> (TM, hidden), f32 accumulation.
    h = lax.dot_general(
        x, w1_ref[...],
        dimension_numbers=(((1,), (1,)), ((), ())),
        preferred_element_type=jnp.float32,
    )
    # Bias + ReLU on the VPU in f32 (v5e's VPU has no bf16 path anyway).
    h = jnp.maximum(h + b1_ref[...], 0.0)
    if w2_ref.dtype != jnp.float32:
        h = h.astype(w2_ref.dtype)

    # fc2 on the MXU, same transposed-RHS pattern but with the tiny weight as
    # LHS: w2 (out_dim, hidden) x h (TM, hidden) -> (out_dim, TM).
    # The result is natively lane-dense (out_dim sublanes x TM lanes), so the
    # output store / HBM writeback is contiguous -- no (TM, 2) masked stores.
    yt = lax.dot_general(
        w2_ref[...], h,
        dimension_numbers=(((1,), (1,)), ((), ())),
        preferred_element_type=jnp.float32,
    )
    o_ref[...] = (yt + b2_ref[...]).astype(o_ref.dtype)


_LANE = 128
_TARGET_TILE_BYTES = 4 << 20  # ~4 MiB x tile per grid step


def _pick_block_batch(B, in_dim, itemsize, requested=None):
    """Batch tile size: big, lane/sublane friendly, never larger than B."""
    if requested is None:
        tm = _TARGET_TILE_BYTES // max(1, in_dim * itemsize)
        tm = max(512, min(8192, tm))
    else:
        tm = max(_LANE, int(requested))
    tm = (tm // _LANE) * _LANE  # multiple of 128: OK as sublane count for
    #                             f32/bf16/int8 x tiles and as the lane width
    #                             of the (out_dim, TM) output block.
    if B <= tm:
        return B  # single grid step; all block dims equal the full array dims
    return tm


@functools.partial(jax.jit, static_argnames=("block_batch",))
def simple_similarity_1l(x, w1, b1, w2, b2, *, block_batch=None):
    """x: (B, input_size); w1: (hidden, input_size); b1: (hidden,);
       w2: (2, hidden); b2: (2,)   [PyTorch nn.Linear layouts]  ->  (B, 2)."""
    B, in_dim = x.shape
    hidden = w1.shape[0]
    out_dim = w2.shape[0]

    b1 = b1.reshape(1, hidden)       # broadcast over batch rows (sublanes)
    b2 = b2.reshape(out_dim, 1)      # broadcast over batch cols (lanes)

    itemsize = x.dtype.itemsize
    TM = _pick_block_batch(B, in_dim, itemsize, block_batch)
    grid = (pl.cdiv(B, TM),)         # partial tail block handled by Pallas

    # VMEM budget: double-buffered x/out tiles + single-buffered weights.
    weight_bytes = (w1.size * w1.dtype.itemsize + w2.size * w2.dtype.itemsize
                    + b1.size * b1.dtype.itemsize + b2.size * b2.dtype.itemsize)
    tile_bytes = TM * in_dim * itemsize + out_dim * TM * itemsize
    need = 2 * tile_bytes + weight_bytes
    # Raise above the default scoped limit when needed, cap at 56 MiB (v7x).
    vmem_limit = int(min(max(2 * need + (4 << 20), 32 << 20), 56 << 20))

    flops = 2 * B * (in_dim * hidden + hidden * out_dim)
    bytes_accessed = (x.size * itemsize + weight_bytes
                      + B * out_dim * itemsize)

    const = lambda i: (0, 0)  # resident weights / biases

    out_t = pl.pallas_call(
        _mlp_kernel,
        out_shape=jax.ShapeDtypeStruct((out_dim, B), x.dtype),
        grid_spec=pltpu.PrefetchScalarGridSpec(
            num_scalar_prefetch=0,
            grid=grid,
            in_specs=[
                # x: tiled over batch, double-buffered by the pipeline.
                pl.BlockSpec((TM, in_dim), lambda i: (i, 0)),
                # Weights/biases: fully VMEM-resident, fetched once,
                # single-buffered (constant index_map).
                pl.BlockSpec((hidden, in_dim), const, pipeline_mode=pl.Buffered(1)),
                pl.BlockSpec((1, hidden), const, pipeline_mode=pl.Buffered(1)),
                pl.BlockSpec((out_dim, hidden), const, pipeline_mode=pl.Buffered(1)),
                pl.BlockSpec((out_dim, 1), const, pipeline_mode=pl.Buffered(1)),
            ],
            # Lane-dense (out_dim, TM) output slab per grid step.
            out_specs=pl.BlockSpec((out_dim, TM), lambda i: (0, i)),
        ),
        compiler_params=pltpu.CompilerParams(
            dimension_semantics=("parallel",),
            vmem_limit_bytes=vmem_limit,
        ),
        cost_estimate=pl.CostEstimate(
            flops=flops, transcendentals=0, bytes_accessed=bytes_accessed
        ),
    )(x, w1, b1, w2, b2)

    # Tiny (2, B) -> (B, 2) transpose outside the kernel (B*out_dim elements).
    return out_t.T


def _xavier_uniform(key, out_features, in_features, dtype=jnp.float32):
    # Matches torch.nn.init.xavier_uniform_ (gain=1) on a (out, in) weight.
    limit = math.sqrt(6.0 / (in_features + out_features))
    return jax.random.uniform(key, (out_features, in_features), dtype=dtype,
                              minval=-limit, maxval=limit)


if __name__ == "__main__":
    input_size, hidden_size, out_size = 32, 32, 2

    key = jax.random.PRNGKey(0)
    kx, kw1, kw2, kx2 = jax.random.split(key, 4)

    # Deterministic xavier_uniform weights (PyTorch (out, in) layout),
    # bias = 0.01 (the module's init function).
    w1 = _xavier_uniform(kw1, hidden_size, input_size)
    b1 = jnp.full((hidden_size,), 0.01, dtype=jnp.float32)
    w2 = _xavier_uniform(kw2, out_size, hidden_size)
    b2 = jnp.full((out_size,), 0.01, dtype=jnp.float32)

    def ref_fn(xv):
        return jnp.maximum(xv @ w1.T + b1, 0.0) @ w2.T + b2

    # 1) Small demo shape (single grid step, full-dim blocks).
    x_small = jax.random.normal(kx, (8, input_size), dtype=jnp.float32)
    y_small = simple_similarity_1l(x_small, w1, b1, w2, b2)
    jax.block_until_ready(y_small)
    assert y_small.shape == (8, out_size)
    assert jnp.allclose(y_small, ref_fn(x_small), atol=1e-4, rtol=1e-4)

    # 2) Larger batch with a deliberately small block_batch: exercises the
    #    multi-step pipelined grid, the partial tail block (1000 % 256 != 0),
    #    the single-buffered resident weights and the lane-dense writeback.
    x_big = jax.random.normal(kx2, (1000, input_size), dtype=jnp.float32)
    y_big = simple_similarity_1l(x_big, w1, b1, w2, b2, block_batch=256)
    jax.block_until_ready(y_big)
    assert y_big.shape == (1000, out_size)
    assert jnp.allclose(y_big, ref_fn(x_big), atol=1e-4, rtol=1e-4)

    print("KERNEL_OK")
</pallas_src>

<mosaic_0001>
module attributes {stable_mosaic.version = 11 : i64} {
  func.func @_mlp_kernel(%arg0: i32, %arg1: memref<8x32xf32, #tpu.memory_space<vmem>>, %arg2: memref<32x32xf32, #tpu.memory_space<vmem>>, %arg3: memref<1x32xf32, #tpu.memory_space<vmem>>, %arg4: memref<2x32xf32, #tpu.memory_space<vmem>>, %arg5: memref<2x1xf32, #tpu.memory_space<vmem>>, %arg6: memref<2x8xf32, #tpu.memory_space<vmem>>) attributes {dimension_semantics = [#tpu.dimension_semantics<parallel>], iteration_bounds = array<i64: 1>, scalar_prefetch = 0 : i64, scratch_operands = 0 : i64, tpu.core_type = #tpu.core_type<tc>, window_params = [{transform_indices = @transform_0, window_bounds = array<i64: 8, 32>}, {pipeline_mode = #tpu.pipeline_mode<synchronous>, transform_indices = @transform_1, window_bounds = array<i64: 32, 32>}, {pipeline_mode = #tpu.pipeline_mode<synchronous>, transform_indices = @transform_2, window_bounds = array<i64: 1, 32>}, {pipeline_mode = #tpu.pipeline_mode<synchronous>, transform_indices = @transform_3, window_bounds = array<i64: 2, 32>}, {pipeline_mode = #tpu.pipeline_mode<synchronous>, transform_indices = @transform_4, window_bounds = array<i64: 2, 1>}, {transform_indices = @transform_5, window_bounds = array<i64: 2, 8>}]} {
    %c0 = arith.constant 0 : index
    %c0_0 = arith.constant 0 : index
    %0 = vector.load %arg1[%c0, %c0_0] : memref<8x32xf32, #tpu.memory_space<vmem>>, vector<8x32xf32>
    %c0_1 = arith.constant 0 : index
    %c0_2 = arith.constant 0 : index
    %1 = vector.load %arg2[%c0_1, %c0_2] : memref<32x32xf32, #tpu.memory_space<vmem>>, vector<32x32xf32>
    %cst = arith.constant dense<0.000000e+00> : vector<8x32xf32>
    %2 = tpu.matmul %0, %1, %cst {dimension_numbers = #tpu.dot_dimension_numbers<[1], [1], [0], [0], [0, 0, 1, 0], [], []>} : vector<8x32xf32>, vector<32x32xf32>, vector<8x32xf32> -> vector<8x32xf32>
    %c0_3 = arith.constant 0 : index
    %c0_4 = arith.constant 0 : index
    %3 = vector.load %arg3[%c0_3, %c0_4] : memref<1x32xf32, #tpu.memory_space<vmem>>, vector<1x32xf32>
    %4 = vector.broadcast %3 : vector<1x32xf32> to vector<8x32xf32>
    %5 = arith.addf %2, %4 : vector<8x32xf32>
    %cst_5 = arith.constant 0.000000e+00 : f32
    %6 = vector.broadcast %cst_5 : f32 to vector<8x32xf32>
    %7 = arith.maximumf %5, %6 : vector<8x32xf32>
    %c0_6 = arith.constant 0 : index
    %c0_7 = arith.constant 0 : index
    %8 = vector.load %arg4[%c0_6, %c0_7] : memref<2x32xf32, #tpu.memory_space<vmem>>, vector<2x32xf32>
    %cst_8 = arith.constant dense<0.000000e+00> : vector<2x8xf32>
    %9 = tpu.matmul %8, %7, %cst_8 {dimension_numbers = #tpu.dot_dimension_numbers<[1], [1], [0], [0], [0, 0, 1, 0], [], []>} : vector<2x32xf32>, vector<8x32xf32>, vector<2x8xf32> -> vector<2x8xf32>
    %c0_9 = arith.constant 0 : index
    %c0_10 = arith.constant 0 : index
    %10 = vector.load %arg5[%c0_9, %c0_10] : memref<2x1xf32, #tpu.memory_space<vmem>>, vector<2x1xf32>
    %11 = vector.broadcast %10 : vector<2x1xf32> to vector<2x8xf32>
    %12 = arith.addf %9, %11 : vector<2x8xf32>
    %c0_11 = arith.constant 0 : index
    %c0_12 = arith.constant 0 : index
    %13 = vector.load %arg6[%c0_11, %c0_12] : memref<2x8xf32, #tpu.memory_space<vmem>>, vector<2x8xf32>
    tpu.vector_store %arg6[%c0_11, %c0_12], %12 {strides = array<i32>} : memref<2x8xf32, #tpu.memory_space<vmem>>, vector<2x8xf32>,
    return
  }
  func.func @transform_0(%arg0: i32) -> (i32, i32) {
    %c0_i32 = arith.constant 0 : i32
    %c0_i32_0 = arith.constant 0 : i32
    return %arg0, %c0_i32 : i32, i32
  }
  func.func @transform_1(%arg0: i32) -> (i32, i32) {
    %c0_i32 = arith.constant 0 : i32
    %c0_i32_0 = arith.constant 0 : i32
    %c0_i32_1 = arith.constant 0 : i32
    return %c0_i32, %c0_i32_0 : i32, i32
  }
  func.func @transform_2(%arg0: i32) -> (i32, i32) {
    %c0_i32 = arith.constant 0 : i32
    %c0_i32_0 = arith.constant 0 : i32
    %c0_i32_1 = arith.constant 0 : i32
    return %c0_i32, %c0_i32_0 : i32, i32
  }
  func.func @transform_3(%arg0: i32) -> (i32, i32) {
    %c0_i32 = arith.constant 0 : i32
    %c0_i32_0 = arith.constant 0 : i32
    %c0_i32_1 = arith.constant 0 : i32
    return %c0_i32, %c0_i32_0 : i32, i32
  }
  func.func @transform_4(%arg0: i32) -> (i32, i32) {
    %c0_i32 = arith.constant 0 : i32
    %c0_i32_0 = arith.constant 0 : i32
    %c0_i32_1 = arith.constant 0 : i32
    return %c0_i32, %c0_i32_0 : i32, i32
  }
  func.func @transform_5(%arg0: i32) -> (i32, i32) {
    %c0_i32 = arith.constant 0 : i32
    %c0_i32_0 = arith.constant 0 : i32
    return %c0_i32, %arg0 : i32, i32
  }
}

</mosaic_0001>

<llo_original>
// kernel: simple_similarity_1l.1
$region0: #{simple_similarity_1l.1}
  #allocation0 [shape = 'u32[]', space=smem, size = 0x4, offset = 0x4, fixed_abs, tag = 'smem constant byte address 0x4 - core index']
  #allocation1 [shape = 'u32[72,128]{1,0:T(1,128)}', space=vmem, size = 0x9000, scoped, tag = 'internal scratch']
  %s0 = inlined_call_operand.hbm [shape: f32[8,32], index: 0, kind: input, shape index: {}]
  %s1 = inlined_call_operand.hbm [shape: f32[32,32], index: 1, kind: input, shape index: {}]
  %s2 = inlined_call_operand.vmem [shape: f32[1,32], index: 2, kind: input, shape index: {}]
  %s3 = inlined_call_operand.vmem [shape: f32[2,32], index: 3, kind: input, shape index: {}]
  %s4 = inlined_call_operand.vmem [shape: f32[2,1], index: 4, kind: input, shape index: {}]
  %s5 = inlined_call_operand.hbm [shape: f32[2,8], index: 5, kind: output, shape index: {}]
  %s6 = sld [smem:[#allocation0]]
  $region38: #{simple_similarity_1l.1} parent=0
    _
  %s8 = ssub.s32 1, %s6
  %s9 = scalar_select 0, %s8, %s6
  $region1: #{simple_similarity_1l.1} parent=0
    #allocation2 [shape = 'u8[4096]{0}', space=vmem, size = 0x1000, scoped, tag = 'input window, operand 0, single buffered']
    #allocation3 [shape = 's32[1]{0}', space=sflag, size = 0x4, scoped, tag = 'scoped memory for simple_similarity_1l.1']
    #allocation4 [shape = 's32[1]{0}', space=sflag, size = 0x4, scoped, tag = 'scoped memory for simple_similarity_1l.1']
    #allocation5 [shape = 'u8[16384]{0}', space=vmem, size = 0x4000, scoped, tag = 'input window, operand 1, single buffered']
    #allocation6 [shape = 's32[1]{0}', space=sflag, size = 0x4, scoped, tag = 'scoped memory for simple_similarity_1l.1']
    #allocation7 [shape = 'u8[1024]{0}', space=vmem, size = 0x400, scoped, tag = 'output window, operand 0, single buffered']
    %10 = vsyncpa [#allocation3], 0
    %11 = vsyncpa [#allocation6], 0
    %12 = vsyncpa [#allocation4], 0
    // Predicated region
    $region2: #{simple_similarity_1l.1} parent=1 // pred_check
      _
    $region3: #{simple_similarity_1l.1} parent=1 // pred_check_branch
      %14 = sbr.rel (0) target = $region5
    $region4: #{simple_similarity_1l.1} parent=1 // pred_region
      %16 = vsyncadd [#allocation3], 0
      %s18 = sshll.u32 %s0, 4
      %s19 = int_to_ptr.hbm [resolvable:$true] %s18
      %s20 = sshll.u32 [#allocation2], 4
      %s21 = int_to_ptr.vmem [resolvable:$true] %s20
      %23 = dma.hbm_to_vmem [thread:$0]  %s19, 128, %s21, [#allocation3]
    $region5: #{simple_similarity_1l.1} parent=1 // pred_fallthru
      _
    // Predicated region
    $region6: #{simple_similarity_1l.1} parent=1 // pred_check
      _
    $region7: #{simple_similarity_1l.1} parent=1 // pred_check_branch
      %25 = sbr.rel (0) target = $region9
    $region8: #{simple_similarity_1l.1} parent=1 // pred_region
      %27 = vsyncadd [#allocation6], 0
      %s28 = sshll.u32 %s1, 4
      %s29 = int_to_ptr.hbm [resolvable:$true] %s28
      %s30 = sshll.u32 [#allocation5], 4
      %s31 = int_to_ptr.vmem [resolvable:$true] %s30
      %36 = dma.hbm_to_vmem [thread:$0]  %s29, 512, %s31, [#allocation6], 128, 128, 8
    $region9: #{simple_similarity_1l.1} parent=1 // pred_fallthru
      _
    // Predicated region
    $region10: #{simple_similarity_1l.1} parent=1 // pred_check
      _
    $region11: #{simple_similarity_1l.1} parent=1 // pred_check_branch
      %38 = sbr.rel (0) target = $region13
    $region12: #{simple_similarity_1l.1} parent=1 // pred_region
      _
    $region13: #{simple_similarity_1l.1} parent=1 // pred_fallthru
      _
    // Predicated region
    $region14: #{simple_similarity_1l.1} parent=1 // pred_check
      _
    $region15: #{simple_similarity_1l.1} parent=1 // pred_check_branch
      %40 = sbr.rel (0) target = $region17
    $region16: #{simple_similarity_1l.1} parent=1 // pred_region
      _
    $region17: #{simple_similarity_1l.1} parent=1 // pred_fallthru
      _
    // Predicated region
    $region18: #{simple_similarity_1l.1} parent=1 // pred_check
      _
    $region19: #{simple_similarity_1l.1} parent=1 // pred_check_branch
      %42 = sbr.rel (0) target = $region21
    $region20: #{simple_similarity_1l.1} parent=1 // pred_region
      _
    $region21: #{simple_similarity_1l.1} parent=1 // pred_fallthru
      _
    // Predicated region
    $region22: #{simple_similarity_1l.1} parent=1 // pred_check
      _
    $region23: #{simple_similarity_1l.1} parent=1 // pred_check_branch
      %44 = sbr.rel (0) target = $region25
    $region24: #{simple_similarity_1l.1} parent=1 // pred_region
      %46 = dma.done [#allocation3], 128
    $region25: #{simple_similarity_1l.1} parent=1 // pred_fallthru
      _
    // Predicated region
    $region26: #{simple_similarity_1l.1} parent=1 // pred_check
      _
    $region27: #{simple_similarity_1l.1} parent=1 // pred_check_branch
      %48 = sbr.rel (0) target = $region29
    $region28: #{simple_similarity_1l.1} parent=1 // pred_region
      %50 = dma.done [#allocation6], 512
    $region29: #{simple_similarity_1l.1} parent=1 // pred_fallthru
      _
    %v51 = vld [vmem:[#allocation2] sm:$0xff]
    %v52 = vld [vmem:[#allocation5] sm:$0xff]
    %v53 = vld [vmem:[#allocation5 + $0x8] sm:$0xff]
    %v54 = vld [vmem:[#allocation5 + $0x10] sm:$0xff]
    %v55 = vld [vmem:[#allocation5 + $0x18] sm:$0xff]
    %v56 = vld [vmem:[%s2] sm:$0x1]
    %v58 = vperm.slane %v56, 0
    %vm60 = vcmask 261120
    %v62 = vsel %vm60, %v51, 0
    %v65 = vsel %vm60, %v52, 0
    %v68 = vsel %vm60, %v53, 0
    %v71 = vsel %vm60, %v54, 0
    %v74 = vsel %vm60, %v55, 0
    %76 = vmatpush.xpose.msra.mxu0 0.0
    %77 = vmatpush.xpose.msra.mxu0 0.0
    %78 = vmatpush.xpose.msra.mxu0 0.0
    %79 = vmatpush.xpose.msra.mxu0 0.0
    %80 = vmatpush.xpose.msra.mxu0 0.0
    %81 = vmatpush.xpose.msra.mxu0 0.0
    %82 = vmatpush.xpose.msra.mxu0 0.0
    %83 = vmatpush.xpose.msra.mxu0 0.0
    %84 = vmatpush.xpose.msra.mxu0 0.0
    %85 = vmatpush.xpose.msra.mxu0 0.0
    %86 = vmatpush.xpose.msra.mxu0 0.0
    %87 = vmatpush.xpose.msra.mxu0 0.0
    %88 = vmatpush.xpose.msra.mxu0 %v74
    %89 = vmatpush.xpose.msra.mxu0 %v71
    %90 = vmatpush.xpose.msra.mxu0 %v68
    %91 = vmatpush.xpose.msra.mxu0 %v65
    %92 = vmatmul.f32.gmra.mxu0 %v62
    %v93 = vpop.f32.mrf.mxu0
    %v94 = vadd.f32 %v58, %v93
    %95 = vdwg.mxu0
    %v96 = vmax.f32 %v94, 0.0
    %v97 = vld [vmem:[%s3] sm:$0x3]
    %v98 = vld [vmem:[%s4] sm:$0x3]
    %100 = vset.pattern.permute.xlu0 0
    %101 = vperm.xlu0 %100, %v98
    %v102 = vpop.permute.xlu0 %101
    %v105 = vsel %vm60, %v97, 0
    %v108 = vsel %vm60, %v96, 0
    %110 = vmatpush.xpose.msra.mxu0 0.0
    %111 = vmatpush.xpose.msra.mxu0 0.0
    %112 = vmatpush.xpose.msra.mxu0 0.0
    %113 = vmatpush.xpose.msra.mxu0 0.0
    %114 = vmatpush.xpose.msra.mxu0 0.0
    %115 = vmatpush.xpose.msra.mxu0 0.0
    %116 = vmatpush.xpose.msra.mxu0 0.0
    %117 = vmatpush.xpose.msra.mxu0 0.0
    %118 = vmatpush.xpose.msra.mxu0 0.0
    %119 = vmatpush.xpose.msra.mxu0 0.0
    %120 = vmatpush.xpose.msra.mxu0 0.0
    %121 = vmatpush.xpose.msra.mxu0 0.0
    %122 = vmatpush.xpose.msra.mxu0 0.0
    %123 = vmatpush.xpose.msra.mxu0 0.0
    %124 = vmatpush.xpose.msra.mxu0 0.0
    %125 = vmatpush.xpose.msra.mxu0 %v108
    %126 = vmatmul.f32.gmra.mxu0 %v105
    %v127 = vpop.f32.mrf.mxu0
    %v128 = vadd.f32 %v102, %v127
    %129 = vdwg.mxu0
    %vm130 = vcmask 58368
    %131 = vst.msk [vmem:[#allocation7] sm:$0x3] %vm130, %v128
    // Predicated region
    $region30: #{simple_similarity_1l.1} parent=1 // pred_check
      _
    $region31: #{simple_similarity_1l.1} parent=1 // pred_check_branch
      %133 = sbr.rel (0) target = $region33
    $region32: #{simple_similarity_1l.1} parent=1 // pred_region
      %135 = vsyncadd [#allocation4], 0
      %s137 = sshll.u32 [#allocation7], 4
      %s138 = int_to_ptr.vmem [resolvable:$true] %s137
      %s139 = sshll.u32 %s5, 4
      %s140 = int_to_ptr.hbm [resolvable:$true] %s139
      %142 = dma.vmem_to_hbm [thread:$0]  %s138, 32, %s140, [#allocation4]
    $region33: #{simple_similarity_1l.1} parent=1 // pred_fallthru
      _
    // Predicated region
    $region34: #{simple_similarity_1l.1} parent=1 // pred_check
      _
    $region35: #{simple_similarity_1l.1} parent=1 // pred_check_branch
      %144 = sbr.rel (0) target = $region37
    $region36: #{simple_similarity_1l.1} parent=1 // pred_region
      %146 = dma.done [#allocation4], 32
    $region37: #{simple_similarity_1l.1} parent=1 // pred_fallthru
      _
    %147 = vsyncpa [#allocation3], 1
    %148 = vsyncpa [#allocation6], 1
    %149 = vsyncpa [#allocation4], 1

</llo_original>
